<compile_context>
chip_gen: v7x
topology: tpu7x:2x2x1
jax: 0.10.0
libtpu: 0.0.40
codegen_flags: <defaults>
</compile_context>

<pallas_src>
import jax
import jax.numpy as jnp
from jax.experimental import pallas as pl
from jax.experimental.pallas import tpu as pltpu


def _round_up(x: int, m: int) -> int:
    return ((x + m - 1) // m) * m


def _heads_kernel(x_ref, wpi_ref, bpi_ref, wvf_ref, bvf_ref, pi_ref, vf_ref):
    # x_ref:   (TB, F)    activation tile (batch-streamed)
    # wpi_ref: (F, Dpi)   policy weights   (VMEM-resident across grid)
    # bpi_ref: (1, Dpi)   policy bias
    # wvf_ref: (F, Dvf)   value weights
    # bvf_ref: (1, Dvf)   value bias
    # pi_ref:  (TB, Dpi)  latent_pi output
    # vf_ref:  (TB, Dvf)  latent_vf output
    x = x_ref[...]
    y_pi = jnp.dot(x, wpi_ref[...], preferred_element_type=jnp.float32) + bpi_ref[...]
    y_vf = jnp.dot(x, wvf_ref[...], preferred_element_type=jnp.float32) + bvf_ref[...]
    pi_ref[...] = jnp.maximum(y_pi, 0.0).astype(pi_ref.dtype)
    vf_ref[...] = jnp.maximum(y_vf, 0.0).astype(vf_ref.dtype)


def custom_network_forward(features, w_pi, b_pi, w_vf, b_vf, *,
                           batch_tile=2048, min_pallas_batch=1024,
                           force_pallas=False, out_dtype=None):
    """Pallas implementation of CustomNetwork.forward.

    features: [B, F] float32
    w_pi: [F, Dpi], b_pi: [Dpi], w_vf: [F, Dvf], b_vf: [Dvf]
    returns (latent_pi [B, Dpi], latent_vf [B, Dvf])
    """
    B, F = features.shape
    Dpi = w_pi.shape[1]
    Dvf = w_vf.shape[1]
    if out_dtype is None:
        out_dtype = features.dtype

    # Small-B fast path: below ~1K rows the whole problem is one grid step and
    # pallas_call fixed cost dominates; plain jnp (fused by XLA) is faster.
    if (not force_pallas) and B < min_pallas_batch:
        pi = jnp.maximum(features @ w_pi + b_pi, 0.0).astype(out_dtype)
        vf = jnp.maximum(features @ w_vf + b_vf, 0.0).astype(out_dtype)
        return pi, vf

    b_pi2 = b_pi.reshape(1, Dpi)
    b_vf2 = b_vf.reshape(1, Dvf)

    # Large batch tile to amortize per-step grid overhead; capped by (padded) B.
    # TB=2048 keeps the double-buffered VMEM working set ~6 MiB (safe on v5e's
    # 16 MiB scoped default as well as v6e/v7x).  Raise toward 4096 on v7x if
    # desired; still fits without a vmem_limit_bytes override.
    TB = min(batch_tile, _round_up(B, 8))
    grid = (pl.cdiv(B, TB),)

    itemsize_in = jnp.dtype(features.dtype).itemsize
    itemsize_out = jnp.dtype(out_dtype).itemsize
    cost = pl.CostEstimate(
        flops=2 * B * F * (Dpi + Dvf),
        transcendentals=0,
        bytes_accessed=(B * F + F * (Dpi + Dvf) + (Dpi + Dvf)) * itemsize_in
                       + B * (Dpi + Dvf) * itemsize_out,
    )

    latent_pi, latent_vf = pl.pallas_call(
        _heads_kernel,
        out_shape=(jax.ShapeDtypeStruct((B, Dpi), out_dtype),
                   jax.ShapeDtypeStruct((B, Dvf), out_dtype)),
        grid=grid,
        in_specs=[
            pl.BlockSpec((TB, F), lambda i: (i, 0)),      # batch-streamed x
            pl.BlockSpec((F, Dpi), lambda i: (0, 0)),     # resident weights
            pl.BlockSpec((1, Dpi), lambda i: (0, 0)),     # resident bias
            pl.BlockSpec((F, Dvf), lambda i: (0, 0)),
            pl.BlockSpec((1, Dvf), lambda i: (0, 0)),
        ],
        out_specs=(pl.BlockSpec((TB, Dpi), lambda i: (i, 0)),
                   pl.BlockSpec((TB, Dvf), lambda i: (i, 0))),
        compiler_params=pltpu.CompilerParams(
            dimension_semantics=("parallel",),            # megacore sharding on v7x
        ),
        cost_estimate=cost,
    )(features, w_pi, b_pi2, w_vf, b_vf2)

    return latent_pi, latent_vf


def init_params(key, feature_dim, last_layer_dim_pi=64, last_layer_dim_vf=64,
                dtype=jnp.float32):
    """Deterministic init mimicking nn.Linear's default U(-1/sqrt(fan_in), 1/sqrt(fan_in))."""
    k1, k2, k3, k4 = jax.random.split(key, 4)
    bound = 1.0 / jnp.sqrt(jnp.array(feature_dim, dtype))
    w_pi = jax.random.uniform(k1, (feature_dim, last_layer_dim_pi), dtype,
                              minval=-bound, maxval=bound)
    b_pi = jax.random.uniform(k2, (last_layer_dim_pi,), dtype,
                              minval=-bound, maxval=bound)
    w_vf = jax.random.uniform(k3, (feature_dim, last_layer_dim_vf), dtype,
                              minval=-bound, maxval=bound)
    b_vf = jax.random.uniform(k4, (last_layer_dim_vf,), dtype,
                              minval=-bound, maxval=bound)
    return w_pi, b_pi, w_vf, b_vf


if __name__ == "__main__":
    # NOTE: shared_net in the PyTorch module is defined but never used by
    # forward(), so it is intentionally not implemented here.
    key = jax.random.PRNGKey(0)
    k_x, k_p = jax.random.split(key)

    batch = 8
    feature_dim = 32
    dpi, dvf = 64, 64

    features = jax.random.normal(k_x, (batch, feature_dim), jnp.float32)
    w_pi, b_pi, w_vf, b_vf = init_params(k_p, feature_dim, dpi, dvf)

    # Plain-JAX reference.
    ref_pi = jnp.maximum(features @ w_pi + b_pi, 0.0)
    ref_vf = jnp.maximum(features @ w_vf + b_vf, 0.0)

    # 1) Force the Pallas kernel path (small B would otherwise take the jnp
    #    fast path).
    latent_pi, latent_vf = custom_network_forward(
        features, w_pi, b_pi, w_vf, b_vf, force_pallas=True)
    jax.block_until_ready((latent_pi, latent_vf))

    assert latent_pi.shape == (batch, dpi) and latent_vf.shape == (batch, dvf)
    assert jnp.allclose(latent_pi, ref_pi, atol=1e-5, rtol=1e-5)
    assert jnp.allclose(latent_vf, ref_vf, atol=1e-5, rtol=1e-5)

    # 2) Default path (small-B fast path) must agree too.
    fp_pi, fp_vf = custom_network_forward(features, w_pi, b_pi, w_vf, b_vf)
    jax.block_until_ready((fp_pi, fp_vf))
    assert jnp.allclose(fp_pi, ref_pi, atol=1e-5, rtol=1e-5)
    assert jnp.allclose(fp_vf, ref_vf, atol=1e-5, rtol=1e-5)

    print("KERNEL_OK")
</pallas_src>

<mosaic_0001>
module attributes {stable_mosaic.version = 11 : i64} {
  func.func @_heads_kernel(%arg0: i32, %arg1: memref<8x32xf32, #tpu.memory_space<vmem>>, %arg2: memref<32x64xf32, #tpu.memory_space<vmem>>, %arg3: memref<1x64xf32, #tpu.memory_space<vmem>>, %arg4: memref<32x64xf32, #tpu.memory_space<vmem>>, %arg5: memref<1x64xf32, #tpu.memory_space<vmem>>, %arg6: memref<8x64xf32, #tpu.memory_space<vmem>>, %arg7: memref<8x64xf32, #tpu.memory_space<vmem>>) attributes {dimension_semantics = [#tpu.dimension_semantics<parallel>], iteration_bounds = array<i64: 1>, scalar_prefetch = 0 : i64, scratch_operands = 0 : i64, tpu.core_type = #tpu.core_type<tc>, window_params = [{transform_indices = @transform_0, window_bounds = array<i64: 8, 32>}, {pipeline_mode = #tpu.pipeline_mode<synchronous>, transform_indices = @transform_1, window_bounds = array<i64: 32, 64>}, {pipeline_mode = #tpu.pipeline_mode<synchronous>, transform_indices = @transform_2, window_bounds = array<i64: 1, 64>}, {pipeline_mode = #tpu.pipeline_mode<synchronous>, transform_indices = @transform_3, window_bounds = array<i64: 32, 64>}, {pipeline_mode = #tpu.pipeline_mode<synchronous>, transform_indices = @transform_4, window_bounds = array<i64: 1, 64>}, {transform_indices = @transform_5, window_bounds = array<i64: 8, 64>}, {transform_indices = @transform_6, window_bounds = array<i64: 8, 64>}]} {
    %c0 = arith.constant 0 : index
    %c0_0 = arith.constant 0 : index
    %0 = vector.load %arg1[%c0, %c0_0] : memref<8x32xf32, #tpu.memory_space<vmem>>, vector<8x32xf32>
    %c0_1 = arith.constant 0 : index
    %c0_2 = arith.constant 0 : index
    %1 = vector.load %arg2[%c0_1, %c0_2] : memref<32x64xf32, #tpu.memory_space<vmem>>, vector<32x64xf32>
    %cst = arith.constant dense<0.000000e+00> : vector<8x64xf32>
    %2 = tpu.matmul %0, %1, %cst {dimension_numbers = #tpu.dot_dimension_numbers<[1], [0], [0], [1], [0, 0, 1, 1], [], []>} : vector<8x32xf32>, vector<32x64xf32>, vector<8x64xf32> -> vector<8x64xf32>
    %c0_3 = arith.constant 0 : index
    %c0_4 = arith.constant 0 : index
    %3 = vector.load %arg3[%c0_3, %c0_4] : memref<1x64xf32, #tpu.memory_space<vmem>>, vector<1x64xf32>
    %4 = vector.broadcast %3 : vector<1x64xf32> to vector<8x64xf32>
    %5 = arith.addf %2, %4 : vector<8x64xf32>
    %c0_5 = arith.constant 0 : index
    %c0_6 = arith.constant 0 : index
    %6 = vector.load %arg4[%c0_5, %c0_6] : memref<32x64xf32, #tpu.memory_space<vmem>>, vector<32x64xf32>
    %cst_7 = arith.constant dense<0.000000e+00> : vector<8x64xf32>
    %7 = tpu.matmul %0, %6, %cst_7 {dimension_numbers = #tpu.dot_dimension_numbers<[1], [0], [0], [1], [0, 0, 1, 1], [], []>} : vector<8x32xf32>, vector<32x64xf32>, vector<8x64xf32> -> vector<8x64xf32>
    %c0_8 = arith.constant 0 : index
    %c0_9 = arith.constant 0 : index
    %8 = vector.load %arg5[%c0_8, %c0_9] : memref<1x64xf32, #tpu.memory_space<vmem>>, vector<1x64xf32>
    %9 = vector.broadcast %8 : vector<1x64xf32> to vector<8x64xf32>
    %10 = arith.addf %7, %9 : vector<8x64xf32>
    %cst_10 = arith.constant 0.000000e+00 : f32
    %11 = vector.broadcast %cst_10 : f32 to vector<8x64xf32>
    %12 = arith.maximumf %5, %11 : vector<8x64xf32>
    %c0_11 = arith.constant 0 : index
    %c0_12 = arith.constant 0 : index
    %13 = vector.load %arg6[%c0_11, %c0_12] : memref<8x64xf32, #tpu.memory_space<vmem>>, vector<8x64xf32>
    tpu.vector_store %arg6[%c0_11, %c0_12], %12 {strides = array<i32>} : memref<8x64xf32, #tpu.memory_space<vmem>>, vector<8x64xf32>,
    %cst_13 = arith.constant 0.000000e+00 : f32
    %14 = vector.broadcast %cst_13 : f32 to vector<8x64xf32>
    %15 = arith.maximumf %10, %14 : vector<8x64xf32>
    %c0_14 = arith.constant 0 : index
    %c0_15 = arith.constant 0 : index
    %16 = vector.load %arg7[%c0_14, %c0_15] : memref<8x64xf32, #tpu.memory_space<vmem>>, vector<8x64xf32>
    tpu.vector_store %arg7[%c0_14, %c0_15], %15 {strides = array<i32>} : memref<8x64xf32, #tpu.memory_space<vmem>>, vector<8x64xf32>,
    return
  }
  func.func @transform_0(%arg0: i32) -> (i32, i32) {
    %c0_i32 = arith.constant 0 : i32
    %c0_i32_0 = arith.constant 0 : i32
    return %arg0, %c0_i32 : i32, i32
  }
  func.func @transform_1(%arg0: i32) -> (i32, i32) {
    %c0_i32 = arith.constant 0 : i32
    %c0_i32_0 = arith.constant 0 : i32
    %c0_i32_1 = arith.constant 0 : i32
    return %c0_i32, %c0_i32_0 : i32, i32
  }
  func.func @transform_2(%arg0: i32) -> (i32, i32) {
    %c0_i32 = arith.constant 0 : i32
    %c0_i32_0 = arith.constant 0 : i32
    %c0_i32_1 = arith.constant 0 : i32
    return %c0_i32, %c0_i32_0 : i32, i32
  }
  func.func @transform_3(%arg0: i32) -> (i32, i32) {
    %c0_i32 = arith.constant 0 : i32
    %c0_i32_0 = arith.constant 0 : i32
    %c0_i32_1 = arith.constant 0 : i32
    return %c0_i32, %c0_i32_0 : i32, i32
  }
  func.func @transform_4(%arg0: i32) -> (i32, i32) {
    %c0_i32 = arith.constant 0 : i32
    %c0_i32_0 = arith.constant 0 : i32
    %c0_i32_1 = arith.constant 0 : i32
    return %c0_i32, %c0_i32_0 : i32, i32
  }
  func.func @transform_5(%arg0: i32) -> (i32, i32) {
    %c0_i32 = arith.constant 0 : i32
    %c0_i32_0 = arith.constant 0 : i32
    return %arg0, %c0_i32 : i32, i32
  }
  func.func @transform_6(%arg0: i32) -> (i32, i32) {
    %c0_i32 = arith.constant 0 : i32
    %c0_i32_0 = arith.constant 0 : i32
    return %arg0, %c0_i32 : i32, i32
  }
}

</mosaic_0001>

<llo_original>
// kernel: tpu_custom_call.1
$region0: #{tpu_custom_call.1}
  #allocation0 [shape = 'u32[]', space=smem, size = 0x4, offset = 0x4, fixed_abs, tag = 'smem constant byte address 0x4 - core index']
  #allocation1 [shape = 'u32[144,128]{1,0:T(1,128)}', space=vmem, size = 0x12000, scoped, tag = 'internal scratch']
  %s0 = inlined_call_operand.hbm [shape: f32[8,32], index: 0, kind: input, shape index: {}]
  %s1 = inlined_call_operand.hbm [shape: f32[32,64], index: 1, kind: input, shape index: {}]
  %s2 = inlined_call_operand.vmem [shape: f32[1,64], index: 2, kind: input, shape index: {}]
  %s3 = inlined_call_operand.hbm [shape: f32[32,64], index: 3, kind: input, shape index: {}]
  %s4 = inlined_call_operand.vmem [shape: f32[1,64], index: 4, kind: input, shape index: {}]
  %s5 = inlined_call_operand.hbm [shape: f32[8,64], index: 5, kind: output, shape index: {0}]
  %s6 = inlined_call_operand.hbm [shape: f32[8,64], index: 6, kind: output, shape index: {1}]
  %7 = xla_tuple %s5, %s6
  %s8 = sld [smem:[#allocation0]]
  $region50: #{tpu_custom_call.1} parent=0
    _
  %s10 = ssub.s32 1, %s8
  %s11 = scalar_select 0, %s10, %s8
  $region1: #{tpu_custom_call.1} parent=0
    #allocation2 [shape = 'u8[4096]{0}', space=vmem, size = 0x1000, scoped, tag = 'input window, operand 0, single buffered']
    #allocation3 [shape = 's32[1]{0}', space=sflag, size = 0x4, scoped, tag = 'scoped memory for tpu_custom_call.1']
    #allocation4 [shape = 's32[1]{0}', space=sflag, size = 0x4, scoped, tag = 'scoped memory for tpu_custom_call.1']
    #allocation5 [shape = 'u8[16384]{0}', space=vmem, size = 0x4000, scoped, tag = 'input window, operand 1, single buffered']
    #allocation6 [shape = 's32[1]{0}', space=sflag, size = 0x4, scoped, tag = 'scoped memory for tpu_custom_call.1']
    #allocation7 [shape = 'u8[16384]{0}', space=vmem, size = 0x4000, scoped, tag = 'input window, operand 3, single buffered']
    #allocation8 [shape = 'u8[4096]{0}', space=vmem, size = 0x1000, scoped, tag = 'output window, operand 0, single buffered']
    #allocation9 [shape = 'u8[4096]{0}', space=vmem, size = 0x1000, scoped, tag = 'output window, operand 1, single buffered']
    #allocation10 [shape = 's32[1]{0}', space=sflag, size = 0x4, scoped, tag = 'scoped memory for tpu_custom_call.1']
    %12 = vsyncpa [#allocation3], 0
    %13 = vsyncpa [#allocation6], 0
    %14 = vsyncpa [#allocation4], 0
    %15 = vsyncpa [#allocation10], 0
    // Predicated region
    $region2: #{tpu_custom_call.1} parent=1 // pred_check
      _
    $region3: #{tpu_custom_call.1} parent=1 // pred_check_branch
      %17 = sbr.rel (0) target = $region5
    $region4: #{tpu_custom_call.1} parent=1 // pred_region
      %s19 = ssub.s32 128, 128
      %20 = vsyncadd [#allocation3], %s19
      %s22 = sshll.u32 [#allocation2], 4
      %s23 = int_to_ptr.vmem [resolvable:$true] %s22
      %25 = dma.hbm_to_vmem [thread:$0]  %s0, 128, %s23, [#allocation3]
    $region5: #{tpu_custom_call.1} parent=1 // pred_fallthru
      _
    // Predicated region
    $region6: #{tpu_custom_call.1} parent=1 // pred_check
      _
    $region7: #{tpu_custom_call.1} parent=1 // pred_check_branch
      %27 = sbr.rel (0) target = $region9
    $region8: #{tpu_custom_call.1} parent=1 // pred_region
      %s29 = ssub.s32 512, 512
      %30 = vsyncadd [#allocation6], %s29
      %s31 = sshll.u32 [#allocation5], 4
      %s32 = int_to_ptr.vmem [resolvable:$true] %s31
      %37 = dma.hbm_to_vmem [thread:$0]  %s1, 512, %s32, [#allocation6], 128, 128, 8
    $region9: #{tpu_custom_call.1} parent=1 // pred_fallthru
      _
    // Predicated region
    $region10: #{tpu_custom_call.1} parent=1 // pred_check
      _
    $region11: #{tpu_custom_call.1} parent=1 // pred_check_branch
      %39 = sbr.rel (0) target = $region13
    $region12: #{tpu_custom_call.1} parent=1 // pred_region
      _
    $region13: #{tpu_custom_call.1} parent=1 // pred_fallthru
      _
    // Predicated region
    $region14: #{tpu_custom_call.1} parent=1 // pred_check
      _
    $region15: #{tpu_custom_call.1} parent=1 // pred_check_branch
      %41 = sbr.rel (0) target = $region17
    $region16: #{tpu_custom_call.1} parent=1 // pred_region
      %s43 = ssub.s32 512, 512
      %44 = vsyncadd [#allocation6], %s43
      %s45 = sshll.u32 [#allocation7], 4
      %s46 = int_to_ptr.vmem [resolvable:$true] %s45
      %51 = dma.hbm_to_vmem [thread:$0]  %s3, 512, %s46, [#allocation6], 128, 128, 8
    $region17: #{tpu_custom_call.1} parent=1 // pred_fallthru
      _
    // Predicated region
    $region18: #{tpu_custom_call.1} parent=1 // pred_check
      _
    $region19: #{tpu_custom_call.1} parent=1 // pred_check_branch
      %53 = sbr.rel (0) target = $region21
    $region20: #{tpu_custom_call.1} parent=1 // pred_region
      _
    $region21: #{tpu_custom_call.1} parent=1 // pred_fallthru
      _
    // Predicated region
    $region22: #{tpu_custom_call.1} parent=1 // pred_check
      _
    $region23: #{tpu_custom_call.1} parent=1 // pred_check_branch
      %55 = sbr.rel (0) target = $region25
    $region24: #{tpu_custom_call.1} parent=1 // pred_region
      %56 = dma.done [#allocation3], 128
    $region25: #{tpu_custom_call.1} parent=1 // pred_fallthru
      _
    // Predicated region
    $region26: #{tpu_custom_call.1} parent=1 // pred_check
      _
    $region27: #{tpu_custom_call.1} parent=1 // pred_check_branch
      %58 = sbr.rel (0) target = $region29
    $region28: #{tpu_custom_call.1} parent=1 // pred_region
      %59 = dma.done [#allocation6], 512
    $region29: #{tpu_custom_call.1} parent=1 // pred_fallthru
      _
    // Predicated region
    $region30: #{tpu_custom_call.1} parent=1 // pred_check
      _
    $region31: #{tpu_custom_call.1} parent=1 // pred_check_branch
      %61 = sbr.rel (0) target = $region33
    $region32: #{tpu_custom_call.1} parent=1 // pred_region
      %62 = dma.done [#allocation6], 512
    $region33: #{tpu_custom_call.1} parent=1 // pred_fallthru
      _
    %v63 = vld [vmem:[#allocation2] sm:$0xff]
    %v64 = vld [vmem:[#allocation5] sm:$0xff]
    %v65 = vld [vmem:[#allocation5 + $0x8] sm:$0xff]
    %v66 = vld [vmem:[#allocation5 + $0x10] sm:$0xff]
    %v67 = vld [vmem:[#allocation5 + $0x18] sm:$0xff]
    %v68 = vld [vmem:[%s2] sm:$0x1]
    %v70 = vlaneseq
    %v71 = vshrl.u32 %v70, 7
    %v72 = vsub.s32 0, %v71
    %v73 = vrot.slane %v68, %v72
    %vm75 = vcmask 261120
    %v77 = vsel %vm75, %v63, 0
    %79 = vmatprep.subr.mxu0 0.0
    %80 = vmatpush1.msra.mxu0 %v64
    %81 = vmatprep.subr.mxu0 0.0
    %82 = vmatpush1.msra.mxu0 %v65
    %83 = vmatprep.subr.mxu0 0.0
    %84 = vmatpush1.msra.mxu0 %v66
    %85 = vmatprep.subr.mxu0 0.0
    %86 = vmatpush1.msra.mxu0 %v67
    %87 = vmatprep.subr.mxu0 0.0
    %88 = vmatpush1.msra.mxu0 0.0
    %89 = vmatprep.subr.mxu0 0.0
    %90 = vmatpush1.msra.mxu0 0.0
    %91 = vmatprep.subr.mxu0 0.0
    %92 = vmatpush1.msra.mxu0 0.0
    %93 = vmatprep.subr.mxu0 0.0
    %94 = vmatpush1.msra.mxu0 0.0
    %95 = vmatprep.subr.mxu0 0.0
    %96 = vmatpush1.msra.mxu0 0.0
    %97 = vmatprep.subr.mxu0 0.0
    %98 = vmatpush1.msra.mxu0 0.0
    %99 = vmatprep.subr.mxu0 0.0
    %100 = vmatpush1.msra.mxu0 0.0
    %101 = vmatprep.subr.mxu0 0.0
    %102 = vmatpush1.msra.mxu0 0.0
    %103 = vmatprep.subr.mxu0 0.0
    %104 = vmatpush1.msra.mxu0 0.0
    %105 = vmatprep.subr.mxu0 0.0
    %106 = vmatpush1.msra.mxu0 0.0
    %107 = vmatprep.subr.mxu0 0.0
    %108 = vmatpush1.msra.mxu0 0.0
    %109 = vmatprep.subr.mxu0 0.0
    %110 = vmatpush1.msra.mxu0 0.0
    %111 = vmatprep.subr.mxu0 0.0
    %112 = vmatpush1.msra.mxu0 0.0
    %113 = vmatprep.subr.mxu0 0.0
    %114 = vmatpush1.msra.mxu0 0.0
    %115 = vmatprep.subr.mxu0 0.0
    %116 = vmatpush1.msra.mxu0 0.0
    %117 = vmatprep.subr.mxu0 0.0
    %118 = vmatpush1.msra.mxu0 0.0
    %119 = vmatprep.subr.mxu0 0.0
    %120 = vmatpush1.msra.mxu0 0.0
    %121 = vmatprep.subr.mxu0 0.0
    %122 = vmatpush1.msra.mxu0 0.0
    %123 = vmatprep.subr.mxu0 0.0
    %124 = vmatpush1.msra.mxu0 0.0
    %125 = vmatprep.subr.mxu0 0.0
    %126 = vmatpush1.msra.mxu0 0.0
    %127 = vmatprep.subr.mxu0 0.0
    %128 = vmatpush1.msra.mxu0 0.0
    %129 = vmatprep.subr.mxu0 0.0
    %130 = vmatpush1.msra.mxu0 0.0
    %131 = vmatprep.subr.mxu0 0.0
    %132 = vmatpush1.msra.mxu0 0.0
    %133 = vmatprep.subr.mxu0 0.0
    %134 = vmatpush1.msra.mxu0 0.0
    %135 = vmatprep.subr.mxu0 0.0
    %136 = vmatpush1.msra.mxu0 0.0
    %137 = vmatprep.subr.mxu0 0.0
    %138 = vmatpush1.msra.mxu0 0.0
    %139 = vmatprep.subr.mxu0 0.0
    %140 = vmatpush1.msra.mxu0 0.0
    %141 = vmatprep.subr.mxu0 0.0
    %142 = vmatpush1.msra.mxu0 0.0
    %143 = vmatprep.mubr.f32.mxu0 0.0
    %144 = vmatmul.mubr.f32.gmra.mrb[0].mxu0 %v77
    %v145 = vpop.f32.mrb[0].mxu0
    %v146 = vadd.f32 %v73, %v145
    %v147 = vpop.f32.mrb[0].mxu0
    %148 = vdwg.mxu0
    %v149 = vld [vmem:[#allocation7] sm:$0xff]
    %v150 = vld [vmem:[#allocation7 + $0x8] sm:$0xff]
    %v151 = vld [vmem:[#allocation7 + $0x10] sm:$0xff]
    %v152 = vld [vmem:[#allocation7 + $0x18] sm:$0xff]
    %v153 = vld [vmem:[%s4] sm:$0x1]
    %v155 = vlaneseq
    %v156 = vshrl.u32 %v155, 7
    %v157 = vsub.s32 0, %v156
    %v158 = vrot.slane %v153, %v157
    %160 = vmatprep.subr.mxu0 0.0
    %161 = vmatpush1.msra.mxu0 %v149
    %162 = vmatprep.subr.mxu0 0.0
    %163 = vmatpush1.msra.mxu0 %v150
    %164 = vmatprep.subr.mxu0 0.0
    %165 = vmatpush1.msra.mxu0 %v151
    %166 = vmatprep.subr.mxu0 0.0
    %167 = vmatpush1.msra.mxu0 %v152
    %168 = vmatprep.subr.mxu0 0.0
    %169 = vmatpush1.msra.mxu0 0.0
    %170 = vmatprep.subr.mxu0 0.0
    %171 = vmatpush1.msra.mxu0 0.0
    %172 = vmatprep.subr.mxu0 0.0
    %173 = vmatpush1.msra.mxu0 0.0
    %174 = vmatprep.subr.mxu0 0.0
    %175 = vmatpush1.msra.mxu0 0.0
    %176 = vmatprep.subr.mxu0 0.0
    %177 = vmatpush1.msra.mxu0 0.0
    %178 = vmatprep.subr.mxu0 0.0
    %179 = vmatpush1.msra.mxu0 0.0
    %180 = vmatprep.subr.mxu0 0.0
    %181 = vmatpush1.msra.mxu0 0.0
    %182 = vmatprep.subr.mxu0 0.0
    %183 = vmatpush1.msra.mxu0 0.0
    %184 = vmatprep.subr.mxu0 0.0
    %185 = vmatpush1.msra.mxu0 0.0
    %186 = vmatprep.subr.mxu0 0.0
    %187 = vmatpush1.msra.mxu0 0.0
    %188 = vmatprep.subr.mxu0 0.0
    %189 = vmatpush1.msra.mxu0 0.0
    %190 = vmatprep.subr.mxu0 0.0
    %191 = vmatpush1.msra.mxu0 0.0
    %192 = vmatprep.subr.mxu0 0.0
    %193 = vmatpush1.msra.mxu0 0.0
    %194 = vmatprep.subr.mxu0 0.0
    %195 = vmatpush1.msra.mxu0 0.0
    %196 = vmatprep.subr.mxu0 0.0
    %197 = vmatpush1.msra.mxu0 0.0
    %198 = vmatprep.subr.mxu0 0.0
    %199 = vmatpush1.msra.mxu0 0.0
    %200 = vmatprep.subr.mxu0 0.0
    %201 = vmatpush1.msra.mxu0 0.0
    %202 = vmatprep.subr.mxu0 0.0
    %203 = vmatpush1.msra.mxu0 0.0
    %204 = vmatprep.subr.mxu0 0.0
    %205 = vmatpush1.msra.mxu0 0.0
    %206 = vmatprep.subr.mxu0 0.0
    %207 = vmatpush1.msra.mxu0 0.0
    %208 = vmatprep.subr.mxu0 0.0
    %209 = vmatpush1.msra.mxu0 0.0
    %210 = vmatprep.subr.mxu0 0.0
    %211 = vmatpush1.msra.mxu0 0.0
    %212 = vmatprep.subr.mxu0 0.0
    %213 = vmatpush1.msra.mxu0 0.0
    %214 = vmatprep.subr.mxu0 0.0
    %215 = vmatpush1.msra.mxu0 0.0
    %216 = vmatprep.subr.mxu0 0.0
    %217 = vmatpush1.msra.mxu0 0.0
    %218 = vmatprep.subr.mxu0 0.0
    %219 = vmatpush1.msra.mxu0 0.0
    %220 = vmatprep.subr.mxu0 0.0
    %221 = vmatpush1.msra.mxu0 0.0
    %222 = vmatprep.subr.mxu0 0.0
    %223 = vmatpush1.msra.mxu0 0.0
    %224 = vmatprep.mubr.f32.mxu0 0.0
    %225 = vmatmul.mubr.f32.gmra.mrb[0].mxu0 %v77
    %v226 = vpop.f32.mrb[0].mxu0
    %v227 = vadd.f32 %v158, %v226
    %v228 = vpop.f32.mrb[0].mxu0
    %229 = vdwg.mxu0
    %v230 = vmax.f32 %v146, 0.0
    %vm231 = vcmask 523264
    %232 = vst.msk [vmem:[#allocation8] sm:$0xff] %vm231, %v230
    %v233 = vmax.f32 %v227, 0.0
    %234 = vst.msk [vmem:[#allocation9] sm:$0xff] %vm231, %v233
    // Predicated region
    $region34: #{tpu_custom_call.1} parent=1 // pred_check
      _
    $region35: #{tpu_custom_call.1} parent=1 // pred_check_branch
      %236 = sbr.rel (0) target = $region37
    $region36: #{tpu_custom_call.1} parent=1 // pred_region
      %s238 = ssub.s32 128, 128
      %239 = vsyncadd [#allocation4], %s238
      %s241 = sshll.u32 [#allocation8], 4
      %s242 = int_to_ptr.vmem [resolvable:$true] %s241
      %244 = dma.vmem_to_hbm [thread:$0]  %s242, 128, %s5, [#allocation4]
    $region37: #{tpu_custom_call.1} parent=1 // pred_fallthru
      _
    // Predicated region
    $region38: #{tpu_custom_call.1} parent=1 // pred_check
      _
    $region39: #{tpu_custom_call.1} parent=1 // pred_check_branch
      %246 = sbr.rel (0) target = $region41
    $region40: #{tpu_custom_call.1} parent=1 // pred_region
      %s248 = ssub.s32 128, 128
      %249 = vsyncadd [#allocation10], %s248
      %s251 = sshll.u32 [#allocation9], 4
      %s252 = int_to_ptr.vmem [resolvable:$true] %s251
      %254 = dma.vmem_to_hbm [thread:$0]  %s252, 128, %s6, [#allocation10]
    $region41: #{tpu_custom_call.1} parent=1 // pred_fallthru
      _
    // Predicated region
    $region42: #{tpu_custom_call.1} parent=1 // pred_check
      _
    $region43: #{tpu_custom_call.1} parent=1 // pred_check_branch
      %256 = sbr.rel (0) target = $region45
    $region44: #{tpu_custom_call.1} parent=1 // pred_region
      %257 = dma.done [#allocation4], 128
    $region45: #{tpu_custom_call.1} parent=1 // pred_fallthru
      _
    // Predicated region
    $region46: #{tpu_custom_call.1} parent=1 // pred_check
      _
    $region47: #{tpu_custom_call.1} parent=1 // pred_check_branch
      %259 = sbr.rel (0) target = $region49
    $region48: #{tpu_custom_call.1} parent=1 // pred_region
      %260 = dma.done [#allocation10], 128
    $region49: #{tpu_custom_call.1} parent=1 // pred_fallthru
      _
    %261 = vsyncpa [#allocation3], 1
    %262 = vsyncpa [#allocation6], 1
    %263 = vsyncpa [#allocation4], 1
    %264 = vsyncpa [#allocation10], 1

</llo_original>
